<compile_context>
chip_gen: v7x
topology: tpu7x:2x2x1
jax: 0.10.0
libtpu: 0.0.40
codegen_flags: <defaults>
</compile_context>

<pallas_src>
import functools

import jax
import jax.numpy as jnp
from jax.experimental import pallas as pl
from jax.experimental.pallas import tpu as pltpu


def _round_up(n, m):
    return ((n + m - 1) // m) * m


def _kernel_lane_dense(x_ref, w1_ref, b1_ref, w2t_ref, b2t_ref, o_ref, *, matmul_dtype):
    """output_dim < 128 path: writes a transposed, lane-dense (1, O, Bt) output block."""
    x = x_ref[...]
    w1 = w1_ref[...]
    if matmul_dtype is not None:                 # in-kernel cast: no extra HBM pass
        x = x.astype(matmul_dtype)
        w1 = w1.astype(matmul_dtype)
    h = jnp.dot(x, w1, preferred_element_type=jnp.float32)       # (Bt, H) on the MXU
    h = jnp.tanh(h + b1_ref[...])                                # f32 EUP tanh
    # yT[O, Bt] = W2^T[O, H] . h[Bt, H]^T  -- contract last dims (trans_b MXU form);
    # only the tiny (O, H) weight was moved, once, in the wrapper (no per-tile h transpose).
    yT = jax.lax.dot_general(
        w2t_ref[...], h,
        dimension_numbers=(((1,), (1,)), ((), ())),
        preferred_element_type=jnp.float32)                      # (O, Bt)
    yT = yT + b2t_ref[...]                                       # (O, 1) broadcast
    yT = pl.reciprocal(1.0 + jnp.exp(-yT), approx=False)         # EUP sigmoid
    o_ref[...] = yT.reshape(o_ref.shape).astype(o_ref.dtype)     # dense (1, O, Bt) store


def _kernel_wide(x_ref, w1_ref, b1_ref, w2_ref, b2_ref, o_ref, *, matmul_dtype):
    """output_dim >= 128 path: the natural (Bt, O) output block is already lane-dense."""
    x = x_ref[...]
    w1 = w1_ref[...]
    if matmul_dtype is not None:
        x = x.astype(matmul_dtype)
        w1 = w1.astype(matmul_dtype)
    h = jnp.dot(x, w1, preferred_element_type=jnp.float32)
    h = jnp.tanh(h + b1_ref[...])
    y = jnp.dot(h, w2_ref[...], preferred_element_type=jnp.float32) + b2_ref[...]
    y = pl.reciprocal(1.0 + jnp.exp(-y), approx=False)
    o_ref[...] = y.astype(o_ref.dtype)


def shallow_nn_forward(x, w1, b1, w2, b2, *, block_b=8192, matmul_dtype=None):
    """Fused ShallowNN forward.  x: (B, D); w1: (D, H); b1: (1, H); w2: (H, O); b2: (1, O)."""
    B, D = x.shape
    H = w1.shape[1]
    O = w2.shape[1]
    out_dtype = jnp.float32
    lane_dense = O < 128

    # ---- batch-tile selection -------------------------------------------------
    # Lane-dense (transposed) output wants Bt % 128 == 0; otherwise sublane alignment.
    align = 128 if lane_dense else (16 if matmul_dtype == jnp.bfloat16 else 8)
    # Big tiles amortize per-grid-step overhead, but keep >= 2 tiles when the batch
    # allows it so v7x's two TensorCores both get work (neutral on v5e/v6e).
    Bt = min(_round_up(block_b, align), _round_up(pl.cdiv(B, 2), align))
    Bt = max(Bt, align)
    # VMEM-aware cap: x double-buffer + out double-buffer + f32 intermediates (with 2x
    # slack).  Target < 24 MiB so it fits v7x's 32 MiB scoped / 64 MiB physical VMEM.
    per_row = (2 * D * x.dtype.itemsize
               + 2 * max(O, 1) * 4
               + 2 * (H + max(O, 1)) * 4)
    cap = max(align, ((24 * 1024 * 1024) // per_row // align) * align)
    Bt = min(Bt, cap)

    # Only the tiny single-tile case pads (cost negligible).  The streaming large-batch
    # path never pads: Pallas handles the ragged last x tile (garbage tail rows are
    # independent and their outputs are discarded / OOB writes dropped).
    if B < Bt:
        x = jnp.pad(x, ((0, Bt - B), (0, 0)))
    rows = x.shape[0]
    n_tiles = pl.cdiv(rows, Bt)

    b1 = b1.astype(jnp.float32).reshape(1, H)
    w2 = w2.astype(jnp.float32)

    def resident_spec(shape):
        zeros = (0,) * len(shape)
        # Same block every grid step -> stays VMEM-resident for the whole call.
        return pl.BlockSpec(shape, lambda i, _z=zeros: _z)

    x_spec = pl.BlockSpec((Bt, D), lambda i: (i, 0))

    cparams = pltpu.CompilerParams(
        dimension_semantics=("parallel",),          # v7x: shard batch tiles over both TCs
        vmem_limit_bytes=32 * 1024 * 1024,
    )
    cost = pl.CostEstimate(
        flops=2 * rows * D * H + 2 * rows * H * O,
        transcendentals=rows * (H + O),
        bytes_accessed=(rows * D * x.dtype.itemsize + rows * O * 4
                        + (D * H + H + H * O + O) * 4),
    )

    if lane_dense:
        w2t = w2.T.reshape(O, H)                     # tiny one-off transpose (wrapper)
        b2t = b2.astype(jnp.float32).reshape(O, 1)
        kernel = functools.partial(_kernel_lane_dense, matmul_dtype=matmul_dtype)
        out = pl.pallas_call(
            kernel,
            out_shape=jax.ShapeDtypeStruct((n_tiles, O, Bt), out_dtype),
            grid_spec=pltpu.PrefetchScalarGridSpec(
                num_scalar_prefetch=0,
                grid=(n_tiles,),
                in_specs=[
                    x_spec,
                    resident_spec((D, H)),
                    resident_spec((1, H)),
                    resident_spec((O, H)),
                    resident_spec((O, 1)),
                ],
                out_specs=pl.BlockSpec((1, O, Bt), lambda i: (i, 0, 0)),
            ),
            compiler_params=cparams,
            cost_estimate=cost,
        )(x, w1, b1, w2t, b2t)
        # (n_tiles, O, Bt) -> (B, O); tiny wrapper-side reshuffle of the small output.
        return jnp.transpose(out, (0, 2, 1)).reshape(n_tiles * Bt, O)[:B]

    b2 = b2.astype(jnp.float32).reshape(1, O)
    kernel = functools.partial(_kernel_wide, matmul_dtype=matmul_dtype)
    out = pl.pallas_call(
        kernel,
        out_shape=jax.ShapeDtypeStruct((rows, O), out_dtype),
        grid_spec=pltpu.PrefetchScalarGridSpec(
            num_scalar_prefetch=0,
            grid=(n_tiles,),
            in_specs=[
                x_spec,
                resident_spec((D, H)),
                resident_spec((1, H)),
                resident_spec((H, O)),
                resident_spec((1, O)),
            ],
            out_specs=pl.BlockSpec((Bt, O), lambda i: (i, 0)),
        ),
        compiler_params=cparams,
        cost_estimate=cost,
    )(x, w1, b1, w2, b2)
    return out[:B]


def init_params(key, input_dim, hidden_dim=64, output_dim=1, dtype=jnp.float32):
    """Deterministic PyTorch-style (Kaiming-uniform-ish) init. Weights stored (in, out)."""
    k1, k2, k3, k4 = jax.random.split(key, 4)
    bound1 = 1.0 / jnp.sqrt(input_dim)
    bound2 = 1.0 / jnp.sqrt(hidden_dim)
    w1 = jax.random.uniform(k1, (input_dim, hidden_dim), dtype, -bound1, bound1)
    b1 = jax.random.uniform(k2, (1, hidden_dim), dtype, -bound1, bound1)
    w2 = jax.random.uniform(k3, (hidden_dim, output_dim), dtype, -bound2, bound2)
    b2 = jax.random.uniform(k4, (1, output_dim), dtype, -bound2, bound2)
    return w1, b1, w2, b2


def reference_forward(x, w1, b1, w2, b2):
    h = jnp.tanh(x @ w1 + b1)
    return jax.nn.sigmoid(h @ w2 + b2)


if __name__ == "__main__":
    key = jax.random.PRNGKey(0)
    kx, kp, kx2, kp2 = jax.random.split(key, 4)

    # 1) Small shape consistent with the module (single tile, output_dim=1).
    B, D, H, O = 8, 32, 64, 1
    x = jax.random.normal(kx, (B, D), jnp.float32)
    w1, b1, w2, b2 = init_params(kp, D, H, O)
    out = jax.block_until_ready(shallow_nn_forward(x, w1, b1, w2, b2))
    ref = reference_forward(x, w1, b1, w2, b2)
    assert out.shape == (B, O)
    assert jnp.allclose(out, ref, atol=2e-3), "f32 single-tile mismatch"

    # 2) Multi-tile ragged batch (grid pipelining, no wrapper pad, two tiles for v7x).
    B2 = 1000
    x2 = jax.random.normal(kx2, (B2, D), jnp.float32)
    out2 = jax.block_until_ready(shallow_nn_forward(x2, w1, b1, w2, b2))
    ref2 = reference_forward(x2, w1, b1, w2, b2)
    assert out2.shape == (B2, 1)
    assert jnp.allclose(out2, ref2, atol=2e-3), "f32 multi-tile mismatch"

    # 3) bf16 MXU operands, cast in-kernel (no extra HBM pass); looser tolerance.
    out3 = jax.block_until_ready(
        shallow_nn_forward(x2, w1, b1, w2, b2, matmul_dtype=jnp.bfloat16))
    assert jnp.allclose(out3, ref2, atol=2e-2), "bf16 multi-tile mismatch"

    # 4) Small output_dim > 1 -> lane-dense transposed-output path.
    O4 = 3
    w1b, b1b, w2b, b2b = init_params(kp2, D, H, O4)
    out4 = jax.block_until_ready(shallow_nn_forward(x, w1b, b1b, w2b, b2b))
    ref4 = reference_forward(x, w1b, b1b, w2b, b2b)
    assert out4.shape == (B, O4)
    assert jnp.allclose(out4, ref4, atol=2e-3), "lane-dense O=3 mismatch"

    # 5) Wide output_dim (>=128) -> natural (Bt, O) lane-dense path.
    O5 = 128
    w1c, b1c, w2c, b2c = init_params(kp2, D, H, O5)
    out5 = jax.block_until_ready(shallow_nn_forward(x, w1c, b1c, w2c, b2c))
    ref5 = reference_forward(x, w1c, b1c, w2c, b2c)
    assert out5.shape == (B, O5)
    assert jnp.allclose(out5, ref5, atol=2e-3), "wide output_dim mismatch"

    print("KERNEL_OK")
</pallas_src>

<mosaic_0001>
module attributes {stable_mosaic.version = 11 : i64} {
  func.func @_kernel_lane_dense(%arg0: i32, %arg1: memref<128x32xf32, #tpu.memory_space<vmem>>, %arg2: memref<32x64xf32, #tpu.memory_space<vmem>>, %arg3: memref<1x64xf32, #tpu.memory_space<vmem>>, %arg4: memref<1x64xf32, #tpu.memory_space<vmem>>, %arg5: memref<1x1xf32, #tpu.memory_space<vmem>>, %arg6: memref<1x1x128xf32, #tpu.memory_space<vmem>>) attributes {dimension_semantics = [#tpu.dimension_semantics<parallel>], iteration_bounds = array<i64: 1>, scalar_prefetch = 0 : i64, scratch_operands = 0 : i64, tpu.core_type = #tpu.core_type<tc>, window_params = [{transform_indices = @transform_0, window_bounds = array<i64: 128, 32>}, {pipeline_mode = #tpu.pipeline_mode<synchronous>, transform_indices = @transform_1, window_bounds = array<i64: 32, 64>}, {pipeline_mode = #tpu.pipeline_mode<synchronous>, transform_indices = @transform_2, window_bounds = array<i64: 1, 64>}, {pipeline_mode = #tpu.pipeline_mode<synchronous>, transform_indices = @transform_3, window_bounds = array<i64: 1, 64>}, {pipeline_mode = #tpu.pipeline_mode<synchronous>, transform_indices = @transform_4, window_bounds = array<i64: 1, 1>}, {transform_indices = @transform_5, window_bounds = array<i64: 1, 1, 128>}]} {
    %c0 = arith.constant 0 : index
    %c0_0 = arith.constant 0 : index
    %0 = vector.load %arg1[%c0, %c0_0] : memref<128x32xf32, #tpu.memory_space<vmem>>, vector<128x32xf32>
    %c0_1 = arith.constant 0 : index
    %c0_2 = arith.constant 0 : index
    %1 = vector.load %arg2[%c0_1, %c0_2] : memref<32x64xf32, #tpu.memory_space<vmem>>, vector<32x64xf32>
    %cst = arith.constant dense<0.000000e+00> : vector<128x64xf32>
    %2 = tpu.matmul %0, %1, %cst {dimension_numbers = #tpu.dot_dimension_numbers<[1], [0], [0], [1], [0, 0, 1, 1], [], []>} : vector<128x32xf32>, vector<32x64xf32>, vector<128x64xf32> -> vector<128x64xf32>
    %c0_3 = arith.constant 0 : index
    %c0_4 = arith.constant 0 : index
    %3 = vector.load %arg3[%c0_3, %c0_4] : memref<1x64xf32, #tpu.memory_space<vmem>>, vector<1x64xf32>
    %4 = vector.broadcast %3 : vector<1x64xf32> to vector<128x64xf32>
    %5 = arith.addf %2, %4 : vector<128x64xf32>
    %6 = math.tanh %5 : vector<128x64xf32>
    %c0_5 = arith.constant 0 : index
    %c0_6 = arith.constant 0 : index
    %7 = vector.load %arg4[%c0_5, %c0_6] : memref<1x64xf32, #tpu.memory_space<vmem>>, vector<1x64xf32>
    %cst_7 = arith.constant dense<0.000000e+00> : vector<1x128xf32>
    %8 = tpu.matmul %7, %6, %cst_7 {dimension_numbers = #tpu.dot_dimension_numbers<[1], [1], [0], [0], [0, 0, 1, 0], [], []>} : vector<1x64xf32>, vector<128x64xf32>, vector<1x128xf32> -> vector<1x128xf32>
    %c0_8 = arith.constant 0 : index
    %c0_9 = arith.constant 0 : index
    %9 = vector.load %arg5[%c0_8, %c0_9] : memref<1x1xf32, #tpu.memory_space<vmem>>, vector<1x1xf32>
    %10 = vector.broadcast %9 : vector<1x1xf32> to vector<1x128xf32>
    %11 = arith.addf %8, %10 : vector<1x128xf32>
    %cst_10 = arith.constant 0.000000e+00 : f32
    %12 = vector.broadcast %cst_10 : f32 to vector<1x128xf32>
    %13 = arith.subf %12, %11 : vector<1x128xf32>
    %14 = math.exp %13 : vector<1x128xf32>
    %cst_11 = arith.constant 1.000000e+00 : f32
    %15 = vector.broadcast %cst_11 : f32 to vector<1x128xf32>
    %16 = arith.addf %15, %14 : vector<1x128xf32>
    %17 = tpu.reciprocal %16 : vector<1x128xf32> -> vector<1x128xf32>
    %18 = vector.shape_cast %17 : vector<1x128xf32> to vector<1x1x128xf32>
    %c0_12 = arith.constant 0 : index
    %c0_13 = arith.constant 0 : index
    %c0_14 = arith.constant 0 : index
    %19 = vector.load %arg6[%c0_12, %c0_13, %c0_14] : memref<1x1x128xf32, #tpu.memory_space<vmem>>, vector<1x1x128xf32>
    tpu.vector_store %arg6[%c0_12, %c0_13, %c0_14], %18 {strides = array<i32>} : memref<1x1x128xf32, #tpu.memory_space<vmem>>, vector<1x1x128xf32>,
    return
  }
  func.func @transform_0(%arg0: i32) -> (i32, i32) {
    %c0_i32 = arith.constant 0 : i32
    %c0_i32_0 = arith.constant 0 : i32
    return %arg0, %c0_i32 : i32, i32
  }
  func.func @transform_1(%arg0: i32) -> (i32, i32) {
    %c0_i32 = arith.constant 0 : i32
    %c0_i32_0 = arith.constant 0 : i32
    %c0_i32_1 = arith.constant 0 : i32
    return %c0_i32, %c0_i32_0 : i32, i32
  }
  func.func @transform_2(%arg0: i32) -> (i32, i32) {
    %c0_i32 = arith.constant 0 : i32
    %c0_i32_0 = arith.constant 0 : i32
    %c0_i32_1 = arith.constant 0 : i32
    return %c0_i32, %c0_i32_0 : i32, i32
  }
  func.func @transform_3(%arg0: i32) -> (i32, i32) {
    %c0_i32 = arith.constant 0 : i32
    %c0_i32_0 = arith.constant 0 : i32
    %c0_i32_1 = arith.constant 0 : i32
    return %c0_i32, %c0_i32_0 : i32, i32
  }
  func.func @transform_4(%arg0: i32) -> (i32, i32) {
    %c0_i32 = arith.constant 0 : i32
    %c0_i32_0 = arith.constant 0 : i32
    %c0_i32_1 = arith.constant 0 : i32
    return %c0_i32, %c0_i32_0 : i32, i32
  }
  func.func @transform_5(%arg0: i32) -> (i32, i32, i32) {
    %c0_i32 = arith.constant 0 : i32
    %c0_i32_0 = arith.constant 0 : i32
    %c0_i32_1 = arith.constant 0 : i32
    return %arg0, %c0_i32, %c0_i32_0 : i32, i32, i32
  }
}

</mosaic_0001>

<llo_original>
// kernel: tpu_custom_call.1
$region0: #{tpu_custom_call.1}
  #allocation0 [shape = 'u32[]', space=smem, size = 0x4, offset = 0x4, fixed_abs, tag = 'smem constant byte address 0x4 - core index']
  #allocation1 [shape = 'u32[144,128]{1,0:T(1,128)}', space=vmem, size = 0x12000, scoped, tag = 'internal scratch']
  #allocation2 [shape = 'f32[1,1]{1,0:T(1,128)S(1)}', space=vmem, size = 0x200, scoped, tag = 'scoped memory for tpu_custom_call.1']
  %s0 = inlined_call_operand.vmem [shape: f32[128,32], index: 0, kind: input, shape index: {}]
  %s1 = inlined_call_operand.vmem [shape: f32[32,64], index: 1, kind: input, shape index: {}]
  %s2 = inlined_call_operand.vmem [shape: f32[1,64], index: 2, kind: input, shape index: {}]
  %s3 = inlined_call_operand.vmem [shape: f32[1,64], index: 3, kind: input, shape index: {}]
  %s4 = inlined_call_operand.<no memory space> [shape: f32[1,1], index: 4, kind: input, shape index: {}]
  %s5 = inlined_call_operand.hbm [shape: f32[1,1,128], index: 5, kind: output, shape index: {}]
  %s6 = sld [smem:[#allocation0]]
  $region30: #{tpu_custom_call.1} parent=0
    _
  %s8 = ssub.s32 1, %s6
  %s9 = scalar_select 0, %s8, %s6
  %v10 = vstv %s4
  %11 = vst [vmem:[#allocation2] sm:$0x1] %v10
  $region1: #{tpu_custom_call.1} parent=0
    #allocation3 [shape = 'u8[512]{0}', space=vmem, size = 0x400, scoped, tag = 'output window, operand 0, single buffered']
    #allocation4 [shape = 's32[1]{0}', space=sflag, size = 0x4, scoped, tag = 'scoped memory for tpu_custom_call.1']
    %12 = vsyncpa [#allocation4], 0
    // Predicated region
    $region2: #{tpu_custom_call.1} parent=1 // pred_check
      _
    $region3: #{tpu_custom_call.1} parent=1 // pred_check_branch
      %14 = sbr.rel (0) target = $region5
    $region4: #{tpu_custom_call.1} parent=1 // pred_region
      _
    $region5: #{tpu_custom_call.1} parent=1 // pred_fallthru
      _
    // Predicated region
    $region6: #{tpu_custom_call.1} parent=1 // pred_check
      _
    $region7: #{tpu_custom_call.1} parent=1 // pred_check_branch
      %16 = sbr.rel (0) target = $region9
    $region8: #{tpu_custom_call.1} parent=1 // pred_region
      _
    $region9: #{tpu_custom_call.1} parent=1 // pred_fallthru
      _
    // Predicated region
    $region10: #{tpu_custom_call.1} parent=1 // pred_check
      _
    $region11: #{tpu_custom_call.1} parent=1 // pred_check_branch
      %18 = sbr.rel (0) target = $region13
    $region12: #{tpu_custom_call.1} parent=1 // pred_region
      _
    $region13: #{tpu_custom_call.1} parent=1 // pred_fallthru
      _
    // Predicated region
    $region14: #{tpu_custom_call.1} parent=1 // pred_check
      _
    $region15: #{tpu_custom_call.1} parent=1 // pred_check_branch
      %20 = sbr.rel (0) target = $region17
    $region16: #{tpu_custom_call.1} parent=1 // pred_region
      _
    $region17: #{tpu_custom_call.1} parent=1 // pred_fallthru
      _
    // Predicated region
    $region18: #{tpu_custom_call.1} parent=1 // pred_check
      _
    $region19: #{tpu_custom_call.1} parent=1 // pred_check_branch
      %22 = sbr.rel (0) target = $region21
    $region20: #{tpu_custom_call.1} parent=1 // pred_region
      _
    $region21: #{tpu_custom_call.1} parent=1 // pred_fallthru
      _
    %v23 = vld [vmem:[%s0] sm:$0xff]
    %v24 = vld [vmem:[%s0 + $0x8] sm:$0xff]
    %v25 = vld [vmem:[%s0 + $0x10] sm:$0xff]
    %v26 = vld [vmem:[%s0 + $0x18] sm:$0xff]
    %v27 = vld [vmem:[%s0 + $0x20] sm:$0xff]
    %v28 = vld [vmem:[%s0 + $0x28] sm:$0xff]
    %v29 = vld [vmem:[%s0 + $0x30] sm:$0xff]
    %v30 = vld [vmem:[%s0 + $0x38] sm:$0xff]
    %v31 = vld [vmem:[%s0 + $0x40] sm:$0xff]
    %v32 = vld [vmem:[%s0 + $0x48] sm:$0xff]
    %v33 = vld [vmem:[%s0 + $0x50] sm:$0xff]
    %v34 = vld [vmem:[%s0 + $0x58] sm:$0xff]
    %v35 = vld [vmem:[%s0 + $0x60] sm:$0xff]
    %v36 = vld [vmem:[%s0 + $0x68] sm:$0xff]
    %v37 = vld [vmem:[%s0 + $0x70] sm:$0xff]
    %v38 = vld [vmem:[%s0 + $0x78] sm:$0xff]
    %v39 = vld [vmem:[%s1] sm:$0xff]
    %v40 = vld [vmem:[%s1 + $0x8] sm:$0xff]
    %v41 = vld [vmem:[%s1 + $0x10] sm:$0xff]
    %v42 = vld [vmem:[%s1 + $0x18] sm:$0xff]
    %v43 = vld [vmem:[%s2] sm:$0x1]
    %v45 = vlaneseq
    %v46 = vshrl.u32 %v45, 7
    %v47 = vsub.s32 0, %v46
    %v48 = vrot.slane %v43, %v47
    %vm50 = vcmask 261120
    %v52 = vsel %vm50, %v23, 0
    %v55 = vsel %vm50, %v24, 0
    %v58 = vsel %vm50, %v25, 0
    %v61 = vsel %vm50, %v26, 0
    %v64 = vsel %vm50, %v27, 0
    %v67 = vsel %vm50, %v28, 0
    %v70 = vsel %vm50, %v29, 0
    %v73 = vsel %vm50, %v30, 0
    %v76 = vsel %vm50, %v31, 0
    %v79 = vsel %vm50, %v32, 0
    %v82 = vsel %vm50, %v33, 0
    %v85 = vsel %vm50, %v34, 0
    %v88 = vsel %vm50, %v35, 0
    %v91 = vsel %vm50, %v36, 0
    %v94 = vsel %vm50, %v37, 0
    %v97 = vsel %vm50, %v38, 0
    %99 = vmatprep.subr.mxu0 0.0
    %100 = vmatpush1.msra.mxu0 %v39
    %101 = vmatprep.subr.mxu0 0.0
    %102 = vmatpush1.msra.mxu0 %v40
    %103 = vmatprep.subr.mxu0 0.0
    %104 = vmatpush1.msra.mxu0 %v41
    %105 = vmatprep.subr.mxu0 0.0
    %106 = vmatpush1.msra.mxu0 %v42
    %107 = vmatprep.subr.mxu0 0.0
    %108 = vmatpush1.msra.mxu0 0.0
    %109 = vmatprep.subr.mxu0 0.0
    %110 = vmatpush1.msra.mxu0 0.0
    %111 = vmatprep.subr.mxu0 0.0
    %112 = vmatpush1.msra.mxu0 0.0
    %113 = vmatprep.subr.mxu0 0.0
    %114 = vmatpush1.msra.mxu0 0.0
    %115 = vmatprep.subr.mxu0 0.0
    %116 = vmatpush1.msra.mxu0 0.0
    %117 = vmatprep.subr.mxu0 0.0
    %118 = vmatpush1.msra.mxu0 0.0
    %119 = vmatprep.subr.mxu0 0.0
    %120 = vmatpush1.msra.mxu0 0.0
    %121 = vmatprep.subr.mxu0 0.0
    %122 = vmatpush1.msra.mxu0 0.0
    %123 = vmatprep.subr.mxu0 0.0
    %124 = vmatpush1.msra.mxu0 0.0
    %125 = vmatprep.subr.mxu0 0.0
    %126 = vmatpush1.msra.mxu0 0.0
    %127 = vmatprep.subr.mxu0 0.0
    %128 = vmatpush1.msra.mxu0 0.0
    %129 = vmatprep.subr.mxu0 0.0
    %130 = vmatpush1.msra.mxu0 0.0
    %131 = vmatprep.subr.mxu0 0.0
    %132 = vmatpush1.msra.mxu0 0.0
    %133 = vmatprep.subr.mxu0 0.0
    %134 = vmatpush1.msra.mxu0 0.0
    %135 = vmatprep.subr.mxu0 0.0
    %136 = vmatpush1.msra.mxu0 0.0
    %137 = vmatprep.subr.mxu0 0.0
    %138 = vmatpush1.msra.mxu0 0.0
    %139 = vmatprep.subr.mxu0 0.0
    %140 = vmatpush1.msra.mxu0 0.0
    %141 = vmatprep.subr.mxu0 0.0
    %142 = vmatpush1.msra.mxu0 0.0
    %143 = vmatprep.subr.mxu0 0.0
    %144 = vmatpush1.msra.mxu0 0.0
    %145 = vmatprep.subr.mxu0 0.0
    %146 = vmatpush1.msra.mxu0 0.0
    %147 = vmatprep.subr.mxu0 0.0
    %148 = vmatpush1.msra.mxu0 0.0
    %149 = vmatprep.subr.mxu0 0.0
    %150 = vmatpush1.msra.mxu0 0.0
    %151 = vmatprep.subr.mxu0 0.0
    %152 = vmatpush1.msra.mxu0 0.0
    %153 = vmatprep.subr.mxu0 0.0
    %154 = vmatpush1.msra.mxu0 0.0
    %155 = vmatprep.subr.mxu0 0.0
    %156 = vmatpush1.msra.mxu0 0.0
    %157 = vmatprep.subr.mxu0 0.0
    %158 = vmatpush1.msra.mxu0 0.0
    %159 = vmatprep.subr.mxu0 0.0
    %160 = vmatpush1.msra.mxu0 0.0
    %161 = vmatprep.subr.mxu0 0.0
    %162 = vmatpush1.msra.mxu0 0.0
    %163 = vmatprep.mubr.f32.mxu0 0.0
    %164 = vmatmul.mubr.f32.gmra.mrb[0].mxu0 %v52
    %v165 = vpop.f32.mrb[0].mxu0
    %v166 = vadd.f32 %v48, %v165
    %v167 = vpop.f32.mrb[0].mxu0
    %168 = vmatprep.mubr.f32.mxu0 0.0
    %169 = vmatmul.mubr.f32.gmra.mrb[0].mxu0 %v55
    %v170 = vpop.f32.mrb[0].mxu0
    %v171 = vadd.f32 %v48, %v170
    %v172 = vpop.f32.mrb[0].mxu0
    %173 = vmatprep.mubr.f32.mxu0 0.0
    %174 = vmatmul.mubr.f32.gmra.mrb[0].mxu0 %v58
    %v175 = vpop.f32.mrb[0].mxu0
    %v176 = vadd.f32 %v48, %v175
    %v177 = vpop.f32.mrb[0].mxu0
    %178 = vmatprep.mubr.f32.mxu0 0.0
    %179 = vmatmul.mubr.f32.gmra.mrb[0].mxu0 %v61
    %v180 = vpop.f32.mrb[0].mxu0
    %v181 = vadd.f32 %v48, %v180
    %v182 = vpop.f32.mrb[0].mxu0
    %183 = vmatprep.mubr.f32.mxu0 0.0
    %184 = vmatmul.mubr.f32.gmra.mrb[0].mxu0 %v64
    %v185 = vpop.f32.mrb[0].mxu0
    %v186 = vadd.f32 %v48, %v185
    %v187 = vpop.f32.mrb[0].mxu0
    %188 = vmatprep.mubr.f32.mxu0 0.0
    %189 = vmatmul.mubr.f32.gmra.mrb[0].mxu0 %v67
    %v190 = vpop.f32.mrb[0].mxu0
    %v191 = vadd.f32 %v48, %v190
    %v192 = vpop.f32.mrb[0].mxu0
    %193 = vmatprep.mubr.f32.mxu0 0.0
    %194 = vmatmul.mubr.f32.gmra.mrb[0].mxu0 %v70
    %v195 = vpop.f32.mrb[0].mxu0
    %v196 = vadd.f32 %v48, %v195
    %v197 = vpop.f32.mrb[0].mxu0
    %198 = vmatprep.mubr.f32.mxu0 0.0
    %199 = vmatmul.mubr.f32.gmra.mrb[0].mxu0 %v73
    %v200 = vpop.f32.mrb[0].mxu0
    %v201 = vadd.f32 %v48, %v200
    %v202 = vpop.f32.mrb[0].mxu0
    %203 = vmatprep.mubr.f32.mxu0 0.0
    %204 = vmatmul.mubr.f32.gmra.mrb[0].mxu0 %v76
    %v205 = vpop.f32.mrb[0].mxu0
    %v206 = vadd.f32 %v48, %v205
    %v207 = vpop.f32.mrb[0].mxu0
    %208 = vmatprep.mubr.f32.mxu0 0.0
    %209 = vmatmul.mubr.f32.gmra.mrb[0].mxu0 %v79
    %v210 = vpop.f32.mrb[0].mxu0
    %v211 = vadd.f32 %v48, %v210
    %v212 = vpop.f32.mrb[0].mxu0
    %213 = vmatprep.mubr.f32.mxu0 0.0
    %214 = vmatmul.mubr.f32.gmra.mrb[0].mxu0 %v82
    %v215 = vpop.f32.mrb[0].mxu0
    %v216 = vadd.f32 %v48, %v215
    %v217 = vpop.f32.mrb[0].mxu0
    %218 = vmatprep.mubr.f32.mxu0 0.0
    %219 = vmatmul.mubr.f32.gmra.mrb[0].mxu0 %v85
    %v220 = vpop.f32.mrb[0].mxu0
    %v221 = vadd.f32 %v48, %v220
    %v222 = vpop.f32.mrb[0].mxu0
    %223 = vmatprep.mubr.f32.mxu0 0.0
    %224 = vmatmul.mubr.f32.gmra.mrb[0].mxu0 %v88
    %v225 = vpop.f32.mrb[0].mxu0
    %v226 = vadd.f32 %v48, %v225
    %v227 = vpop.f32.mrb[0].mxu0
    %228 = vmatprep.mubr.f32.mxu0 0.0
    %229 = vmatmul.mubr.f32.gmra.mrb[0].mxu0 %v91
    %v230 = vpop.f32.mrb[0].mxu0
    %v231 = vadd.f32 %v48, %v230
    %v232 = vpop.f32.mrb[0].mxu0
    %233 = vmatprep.mubr.f32.mxu0 0.0
    %234 = vmatmul.mubr.f32.gmra.mrb[0].mxu0 %v94
    %v235 = vpop.f32.mrb[0].mxu0
    %v236 = vadd.f32 %v48, %v235
    %v237 = vpop.f32.mrb[0].mxu0
    %238 = vmatprep.mubr.f32.mxu0 0.0
    %239 = vmatmul.mubr.f32.gmra.mrb[0].mxu0 %v97
    %v240 = vpop.f32.mrb[0].mxu0
    %v241 = vadd.f32 %v48, %v240
    %v242 = vpop.f32.mrb[0].mxu0
    %243 = vdwg.mxu0
    %v244 = vtanh.pop %v166
    %v245 = vtanh.pop %v171
    %v246 = vtanh.pop %v176
    %v247 = vtanh.pop %v181
    %v248 = vtanh.pop %v186
    %v249 = vtanh.pop %v191
    %v250 = vtanh.pop %v196
    %v251 = vtanh.pop %v201
    %v252 = vtanh.pop %v206
    %v253 = vtanh.pop %v211
    %v254 = vtanh.pop %v216
    %v255 = vtanh.pop %v221
    %v256 = vtanh.pop %v226
    %v257 = vtanh.pop %v231
    %v258 = vtanh.pop %v236
    %v259 = vtanh.pop %v241
    %v260 = vld [vmem:[%s3] sm:$0x1]
    %v261 = vld [vmem:[#allocation2] sm:$0x1]
    %263 = vset.pattern.permute.xlu0 0
    %264 = vperm.xlu0 %263, %v261
    %v265 = vpop.permute.xlu0 %264
    %v267 = vlaneseq
    %v268 = vshrl.u32 %v267, 7
    %v269 = vsub.s32 0, %v268
    %v270 = vrot.slane %v265, %v269
    %vm271 = vcmask 523264
    %v273 = vsel %vm271, %v260, 0
    %v276 = vsel %vm271, %v244, 0
    %v279 = vsel %vm271, %v245, 0
    %v282 = vsel %vm271, %v246, 0
    %v285 = vsel %vm271, %v247, 0
    %v288 = vsel %vm271, %v248, 0
    %v291 = vsel %vm271, %v249, 0
    %v294 = vsel %vm271, %v250, 0
    %v297 = vsel %vm271, %v251, 0
    %v300 = vsel %vm271, %v252, 0
    %v303 = vsel %vm271, %v253, 0
    %v306 = vsel %vm271, %v254, 0
    %v309 = vsel %vm271, %v255, 0
    %v312 = vsel %vm271, %v256, 0
    %v315 = vsel %vm271, %v257, 0
    %v318 = vsel %vm271, %v258, 0
    %v321 = vsel %vm271, %v259, 0
    %323 = vmatprep.subr.mxu0 0.0
    %324 = vmatpush1.xpose.msra.mxu0 %v276
    %325 = vmatprep.subr.mxu0 0.0
    %326 = vmatpush1.xpose.msra.mxu0 %v279
    %327 = vmatprep.subr.mxu0 0.0
    %328 = vmatpush1.xpose.msra.mxu0 %v282
    %329 = vmatprep.subr.mxu0 0.0
    %330 = vmatpush1.xpose.msra.mxu0 %v285
    %331 = vmatprep.subr.mxu0 0.0
    %332 = vmatpush1.xpose.msra.mxu0 %v288
    %333 = vmatprep.subr.mxu0 0.0
    %334 = vmatpush1.xpose.msra.mxu0 %v291
    %335 = vmatprep.subr.mxu0 0.0
    %336 = vmatpush1.xpose.msra.mxu0 %v294
    %337 = vmatprep.subr.mxu0 0.0
    %338 = vmatpush1.xpose.msra.mxu0 %v297
    %339 = vmatprep.subr.mxu0 0.0
    %340 = vmatpush1.xpose.msra.mxu0 %v300
    %341 = vmatprep.subr.mxu0 0.0
    %342 = vmatpush1.xpose.msra.mxu0 %v303
    %343 = vmatprep.subr.mxu0 0.0
    %344 = vmatpush1.xpose.msra.mxu0 %v306
    %345 = vmatprep.subr.mxu0 0.0
    %346 = vmatpush1.xpose.msra.mxu0 %v309
    %347 = vmatprep.subr.mxu0 0.0
    %348 = vmatpush1.xpose.msra.mxu0 %v312
    %349 = vmatprep.subr.mxu0 0.0
    %350 = vmatpush1.xpose.msra.mxu0 %v315
    %351 = vmatprep.subr.mxu0 0.0
    %352 = vmatpush1.xpose.msra.mxu0 %v318
    %353 = vmatprep.subr.mxu0 0.0
    %354 = vmatpush1.xpose.msra.mxu0 %v321
    %355 = vmatprep.subr.mxu0 0.0
    %356 = vmatpush1.xpose.msra.mxu0 0.0
    %357 = vmatprep.subr.mxu0 0.0
    %358 = vmatpush1.xpose.msra.mxu0 0.0
    %359 = vmatprep.subr.mxu0 0.0
    %360 = vmatpush1.xpose.msra.mxu0 0.0
    %361 = vmatprep.subr.mxu0 0.0
    %362 = vmatpush1.xpose.msra.mxu0 0.0
    %363 = vmatprep.subr.mxu0 0.0
    %364 = vmatpush1.xpose.msra.mxu0 0.0
    %365 = vmatprep.subr.mxu0 0.0
    %366 = vmatpush1.xpose.msra.mxu0 0.0
    %367 = vmatprep.subr.mxu0 0.0
    %368 = vmatpush1.xpose.msra.mxu0 0.0
    %369 = vmatprep.subr.mxu0 0.0
    %370 = vmatpush1.xpose.msra.mxu0 0.0
    %371 = vmatprep.subr.mxu0 0.0
    %372 = vmatpush1.xpose.msra.mxu0 0.0
    %373 = vmatprep.subr.mxu0 0.0
    %374 = vmatpush1.xpose.msra.mxu0 0.0
    %375 = vmatprep.subr.mxu0 0.0
    %376 = vmatpush1.xpose.msra.mxu0 0.0
    %377 = vmatprep.subr.mxu0 0.0
    %378 = vmatpush1.xpose.msra.mxu0 0.0
    %379 = vmatprep.subr.mxu0 0.0
    %380 = vmatpush1.xpose.msra.mxu0 0.0
    %381 = vmatprep.subr.mxu0 0.0
    %382 = vmatpush1.xpose.msra.mxu0 0.0
    %383 = vmatprep.subr.mxu0 0.0
    %384 = vmatpush1.xpose.msra.mxu0 0.0
    %385 = vmatprep.subr.mxu0 0.0
    %386 = vmatpush1.xpose.msra.mxu0 0.0
    %387 = vmatprep.mubr.f32.mxu0 0.0
    %388 = vmatmul.mubr.f32.gmra.mrb[0].mxu0 %v273
    %v389 = vpop.f32.mrb[0].mxu0
    %v390 = vadd.f32 %v270, %v389
    %v391 = vpop.f32.mrb[0].mxu0
    %392 = vdwg.mxu0
    %v393 = vsub.f32 0.0, %v390
    %v394 = vmul.f32 %v393, 1.442695
    %v395 = vpow.pop %v394
    %v396 = vadd.f32 %v395, 1.0
    %v397 = vrcp.pop %v396
    %398 = vst [vmem:[#allocation3] sm:$0x1] %v397
    // Predicated region
    $region22: #{tpu_custom_call.1} parent=1 // pred_check
      _
    $region23: #{tpu_custom_call.1} parent=1 // pred_check_branch
      %400 = sbr.rel (0) target = $region25
    $region24: #{tpu_custom_call.1} parent=1 // pred_region
      %s402 = ssub.s32 16, 16
      %403 = vsyncadd [#allocation4], %s402
      %s405 = sshll.u32 [#allocation3], 4
      %s406 = int_to_ptr.vmem [resolvable:$true] %s405
      %408 = dma.vmem_to_hbm [thread:$0]  %s406, 16, %s5, [#allocation4]
    $region25: #{tpu_custom_call.1} parent=1 // pred_fallthru
      _
    // Predicated region
    $region26: #{tpu_custom_call.1} parent=1 // pred_check
      _
    $region27: #{tpu_custom_call.1} parent=1 // pred_check_branch
      %410 = sbr.rel (0) target = $region29
    $region28: #{tpu_custom_call.1} parent=1 // pred_region
      %411 = dma.done [#allocation4], 16
    $region29: #{tpu_custom_call.1} parent=1 // pred_fallthru
      _
    %412 = vsyncpa [#allocation4], 1

</llo_original>
